<compile_context>
chip_gen: v6e
topology: v6e:2x2x1
jax: 0.10.0
libtpu: 0.0.40
codegen_flags: <defaults>
</compile_context>

<pallas_src>
import functools

import jax
import jax.numpy as jnp
from jax.experimental import pallas as pl
from jax.experimental.pallas import tpu as pltpu


def _round_up(x, m):
    return (x + m - 1) // m * m


def _hann_periodic(win_length):
    # torch.hann_window(win_length, periodic=True)
    n = jnp.arange(win_length, dtype=jnp.float32)
    return 0.5 * (1.0 - jnp.cos(2.0 * jnp.pi * n / win_length))


def _fourier_basis(n_fft, win_length):
    """forward_basis from FullyExportableSTFT.__init__ (real/imag DFT rows * centered window)."""
    freq_cutoff = n_fft // 2 + 1
    window = _hann_periodic(win_length)
    # librosa.util.pad_center(window, n_fft)
    lpad = (n_fft - win_length) // 2
    window = jnp.pad(window, (lpad, n_fft - win_length - lpad))
    k = jnp.arange(freq_cutoff, dtype=jnp.float32)[:, None]
    j = jnp.arange(n_fft, dtype=jnp.float32)[None, :]
    ang = 2.0 * jnp.pi * k * j / n_fft
    # fft(eye)[k, j] = exp(-2*pi*i*j*k/N)  ->  real = cos, imag = -sin
    wr = (jnp.cos(ang) * window[None, :]).T    # (n_fft, freq_cutoff)
    wi = (-jnp.sin(ang) * window[None, :]).T   # (n_fft, freq_cutoff)
    return wr, wi


def _spectrogram_kernel(blocks_hbm, w_ref, o_ref, buf_a, buf_b, sem_a, sem_b,
                        *, fp, tf, tc, nbp, power):
    """One (batch b, frame-tile f) grid step: TF frames -> (TF, Fp) power spectrogram.

    Frames are built in VMEM from manually DMA'd hop-blocks (frame t = [block t | block t+1]);
    hot path per TC-frame chunk is one fused MXU matmul X @ [Wr | Wi] plus VPU elementwise.
    """
    b = pl.program_id(0)
    f = pl.program_id(1)
    nc = tf // tc                       # static number of chunks per tile
    base = b * nbp + f * tf             # first block row of this tile in the flat blocks array

    pending = {}                        # slot -> (copy_a, copy_b), static (unrolled) bookkeeping

    def fetch(c, slot):
        row = pl.multiple_of(base + c * tc, 8)   # base, tc are multiples of 8 by construction
        cp_a = pltpu.make_async_copy(blocks_hbm.at[pl.ds(row, tc), :],
                                     buf_a.at[slot], sem_a.at[slot])
        cp_b = pltpu.make_async_copy(blocks_hbm.at[pl.ds(row + 1, tc), :],
                                     buf_b.at[slot], sem_b.at[slot])
        cp_a.start()
        cp_b.start()
        pending[slot] = (cp_a, cp_b)

    fetch(0, 0)
    for c in range(nc):                 # static (unrolled) chunk loop
        slot = c & 1
        cp_a, cp_b = pending[slot]
        cp_a.wait()
        cp_b.wait()
        if c + 1 < nc:
            fetch(c + 1, 1 - slot)      # prefetch next chunk while computing this one

        # Assemble the (tc, n_fft) frame tile: [block t | block t+1] along lanes (cheap concat).
        x = jnp.concatenate([buf_a[slot], buf_b[slot]], axis=-1)
        # Single fused matmul against [Wr | Wi] -> (tc, 2*fp), f32 accumulation on the MXU.
        y = jnp.dot(x, w_ref[...], preferred_element_type=jnp.float32)
        r = y[:, :fp]
        im = y[:, fp:]
        p2 = r * r + im * im
        if power == 2.0:
            out = p2                    # sqrt-free fast path (module default)
        elif power is None or power == 1.0:
            out = jnp.sqrt(p2)          # magnitude
        else:
            out = p2 ** (power * 0.5)
        o_ref[0, c * tc:(c + 1) * tc, :] = out.astype(o_ref.dtype)


def fully_exportable_spectrogram(waveform, *, n_fft=256, win_length=None,
                                 hop_length=None, power=2.0, pad=0, normalized=False):
    win_length = n_fft if win_length is None else win_length
    hop = win_length // 2 if hop_length is None else hop_length
    freq_cutoff = n_fft // 2 + 1
    # TODO(synk): the in-kernel half-frame assembly assumes hop == n_fft // 2 (the module's
    # default win/hop relationship); other hop values would need a k-way block split.
    assert n_fft == 2 * hop, "kernel fast path requires hop_length == n_fft // 2"

    if pad > 0:
        waveform = jnp.pad(
            waveform, [(0, 0)] * (waveform.ndim - 1) + [(pad, pad)], mode="constant")

    shape = waveform.shape
    wav2d = waveform.reshape(-1, shape[-1]).astype(jnp.float32)
    B, L = wav2d.shape

    # STFT forward: hard-coded reflect pad of 256 per side (as in the PyTorch module).
    # Like torch's reflect pad, this requires L > 256.
    padded = jnp.pad(wav2d, ((0, 0), (256, 256)), mode="reflect")
    Lp = padded.shape[-1]
    T = (Lp - n_fft) // hop + 1

    Fp = _round_up(freq_cutoff, 128)               # lane-padded freq bins (129 -> 256)
    TC = min(128, _round_up(T, 8))                 # frames per DMA chunk / MXU tile
    TF = min(512, _round_up(T, TC))                # frames per grid step
    F = (T + TF - 1) // TF                         # frame tiles per batch row
    NBp = F * TF + 8                               # padded hop-blocks per batch row (+1 reach)

    # Free reshape of the padded signal into non-overlapping hop-wide blocks.  Frame t is
    # [block t | block t+1], assembled inside the kernel -> no frames matrix in HBM.
    padded = jnp.pad(padded, ((0, 0), (0, NBp * hop - Lp)))
    blocks = padded.reshape(B * NBp, hop)

    wr, wi = _fourier_basis(n_fft, win_length)
    if normalized:
        scale = 1.0 / jnp.sqrt(jnp.sum(_hann_periodic(win_length) ** 2))
        wr, wi = wr * scale, wi * scale
    # Fused Fourier basis [Wr | Wi]: one resident VMEM weight buffer, one matmul per chunk.
    w = jnp.concatenate([jnp.pad(wr, ((0, 0), (0, Fp - freq_cutoff))),
                         jnp.pad(wi, ((0, 0), (0, Fp - freq_cutoff)))], axis=1)  # (n_fft, 2*Fp)

    kernel = functools.partial(_spectrogram_kernel, fp=Fp, tf=TF, tc=TC, nbp=NBp, power=power)
    out_p = pl.pallas_call(
        kernel,
        out_shape=jax.ShapeDtypeStruct((B, F * TF, Fp), jnp.float32),
        grid_spec=pltpu.PrefetchScalarGridSpec(
            num_scalar_prefetch=0,
            grid=(B, F),
            in_specs=[pl.BlockSpec(memory_space=pl.ANY),                    # blocks stay in HBM
                      pl.BlockSpec((n_fft, 2 * Fp), lambda b, f: (0, 0))],  # resident basis
            out_specs=pl.BlockSpec((1, TF, Fp), lambda b, f: (b, f, 0)),
            scratch_shapes=[pltpu.VMEM((2, TC, hop), jnp.float32),
                            pltpu.VMEM((2, TC, hop), jnp.float32),
                            pltpu.SemaphoreType.DMA((2,)),
                            pltpu.SemaphoreType.DMA((2,))]),
        compiler_params=pltpu.CompilerParams(
            dimension_semantics=("parallel", "parallel")),
    )(blocks, w)

    spec = out_p[:, :T, :freq_cutoff]
    spec = jnp.transpose(spec, (0, 2, 1))          # (B, freq, frames) — Conv1d channel-major
    return spec.reshape(shape[:-1] + (freq_cutoff, T))


def _reference(waveform, *, n_fft, win_length, hop_length, power):
    """Pure-JAX reference of the PyTorch forward pass (verification only)."""
    freq_cutoff = n_fft // 2 + 1
    wav2d = waveform.reshape(-1, waveform.shape[-1]).astype(jnp.float32)
    padded = jnp.pad(wav2d, ((0, 0), (256, 256)), mode="reflect")
    T = (padded.shape[-1] - n_fft) // hop_length + 1
    idx = jnp.arange(T)[:, None] * hop_length + jnp.arange(n_fft)[None, :]
    frames = padded[:, idx]                                   # (B, T, n_fft)
    wr, wi = _fourier_basis(n_fft, win_length)
    r = jnp.einsum("btn,nf->btf", frames, wr)
    i = jnp.einsum("btn,nf->btf", frames, wi)
    mag = jnp.sqrt(r * r + i * i)
    out = mag * mag if power == 2.0 else mag ** power
    out = jnp.transpose(out, (0, 2, 1))
    return out.reshape(waveform.shape[:-1] + (freq_cutoff, T))


if __name__ == "__main__":
    # Small shapes consistent with the module: reflect pad of 256 requires seq_len > 256.
    n_fft = 256
    win_length = 256
    hop_length = 128
    power = 2.0

    key = jax.random.PRNGKey(0)
    waveform = jax.random.normal(key, (2, 384), dtype=jnp.float32)

    out = fully_exportable_spectrogram(
        waveform, n_fft=n_fft, win_length=win_length, hop_length=hop_length, power=power)
    out = jax.block_until_ready(out)

    ref = _reference(waveform, n_fft=n_fft, win_length=win_length,
                     hop_length=hop_length, power=power)
    assert out.shape == (2, n_fft // 2 + 1, 6), out.shape
    assert jnp.allclose(out, ref, rtol=1e-4, atol=1e-3), "mismatch vs reference"

    print("KERNEL_OK")
</pallas_src>

<mosaic_0001>
module attributes {stable_mosaic.version = 11 : i64} {
  func.func @_spectrogram_kernel(%arg0: i32, %arg1: i32, %arg2: memref<32x128xf32, #tpu.memory_space<any>>, %arg3: memref<256x512xf32, #tpu.memory_space<vmem>>, %arg4: memref<1x8x256xf32, #tpu.memory_space<vmem>>, %arg5: memref<2x8x128xf32, #tpu.memory_space<vmem>>, %arg6: memref<2x8x128xf32, #tpu.memory_space<vmem>>, %arg7: memref<2x!tpu.dma_semaphore, #tpu.memory_space<semaphore_mem>>, %arg8: memref<2x!tpu.dma_semaphore, #tpu.memory_space<semaphore_mem>>) attributes {dimension_semantics = [#tpu.dimension_semantics<parallel>, #tpu.dimension_semantics<parallel>], iteration_bounds = array<i64: 2, 1>, scalar_prefetch = 0 : i64, scratch_operands = 4 : i64, tpu.core_type = #tpu.core_type<tc>, window_params = [{}, {pipeline_mode = #tpu.pipeline_mode<synchronous>, transform_indices = @transform_1, window_bounds = array<i64: 256, 512>}, {transform_indices = @transform_2, window_bounds = array<i64: 1, 8, 256>}]} {
    %c16_i32 = arith.constant 16 : i32
    %0 = arith.muli %arg0, %c16_i32 : i32
    %c8_i32 = arith.constant 8 : i32
    %1 = arith.muli %arg1, %c8_i32 : i32
    %2 = arith.addi %0, %1 : i32
    %c0_i32 = arith.constant 0 : i32
    %3 = arith.addi %2, %c0_i32 : i32
    %4 = tpu.assume_multiple %3, 8 : i32
    %c1_i32 = arith.constant 1 : i32
    %5 = arith.addi %4, %c1_i32 : i32
    %c0_i32_0 = arith.constant 0 : i32
    %c0_i32_1 = arith.constant 0 : i32
    %c0_i32_2 = arith.constant 0 : i32
    %6 = tpu.memref_slice %arg2[%4, %c0_i32_2] : memref<32x128xf32, #tpu.memory_space<any>> -> memref<8x128xf32, #tpu.memory_space<any>>
    %c0_i32_3 = arith.constant 0 : i32
    %c0_i32_4 = arith.constant 0 : i32
    %7 = tpu.memref_slice %arg5[%c0_i32_0, %c0_i32_3, %c0_i32_4] : memref<2x8x128xf32, #tpu.memory_space<vmem>> -> memref<1x8x128xf32, #tpu.memory_space<vmem>>
    %8 = tpu.memref_squeeze %7 : memref<1x8x128xf32, #tpu.memory_space<vmem>> -> memref<8x128xf32, #tpu.memory_space<vmem>>
    %9 = tpu.memref_slice %arg7[%c0_i32_1] : memref<2x!tpu.dma_semaphore, #tpu.memory_space<semaphore_mem>> -> memref<1x!tpu.dma_semaphore, #tpu.memory_space<semaphore_mem>>
    %10 = tpu.memref_squeeze %9 : memref<1x!tpu.dma_semaphore, #tpu.memory_space<semaphore_mem>> -> memref<!tpu.dma_semaphore, #tpu.memory_space<semaphore_mem>>
    tpu.enqueue_dma source(%6 : memref<8x128xf32, #tpu.memory_space<any>>) target(%8 : memref<8x128xf32, #tpu.memory_space<vmem>>) target_semaphore(%10 : memref<!tpu.dma_semaphore, #tpu.memory_space<semaphore_mem>>)
    %c0_i32_5 = arith.constant 0 : i32
    %c0_i32_6 = arith.constant 0 : i32
    %c0_i32_7 = arith.constant 0 : i32
    %11 = tpu.memref_slice %arg2[%5, %c0_i32_7] : memref<32x128xf32, #tpu.memory_space<any>> -> memref<8x128xf32, #tpu.memory_space<any>>
    %c0_i32_8 = arith.constant 0 : i32
    %c0_i32_9 = arith.constant 0 : i32
    %12 = tpu.memref_slice %arg6[%c0_i32_5, %c0_i32_8, %c0_i32_9] : memref<2x8x128xf32, #tpu.memory_space<vmem>> -> memref<1x8x128xf32, #tpu.memory_space<vmem>>
    %13 = tpu.memref_squeeze %12 : memref<1x8x128xf32, #tpu.memory_space<vmem>> -> memref<8x128xf32, #tpu.memory_space<vmem>>
    %14 = tpu.memref_slice %arg8[%c0_i32_6] : memref<2x!tpu.dma_semaphore, #tpu.memory_space<semaphore_mem>> -> memref<1x!tpu.dma_semaphore, #tpu.memory_space<semaphore_mem>>
    %15 = tpu.memref_squeeze %14 : memref<1x!tpu.dma_semaphore, #tpu.memory_space<semaphore_mem>> -> memref<!tpu.dma_semaphore, #tpu.memory_space<semaphore_mem>>
    tpu.enqueue_dma source(%11 : memref<8x128xf32, #tpu.memory_space<any>>) target(%13 : memref<8x128xf32, #tpu.memory_space<vmem>>) target_semaphore(%15 : memref<!tpu.dma_semaphore, #tpu.memory_space<semaphore_mem>>)
    %c0_i32_10 = arith.constant 0 : i32
    %c0_i32_11 = arith.constant 0 : i32
    %c0_i32_12 = arith.constant 0 : i32
    %16 = tpu.memref_slice %arg2[%4, %c0_i32_12] : memref<32x128xf32, #tpu.memory_space<any>> -> memref<8x128xf32, #tpu.memory_space<any>>
    %c0_i32_13 = arith.constant 0 : i32
    %c0_i32_14 = arith.constant 0 : i32
    %17 = tpu.memref_slice %arg5[%c0_i32_10, %c0_i32_13, %c0_i32_14] : memref<2x8x128xf32, #tpu.memory_space<vmem>> -> memref<1x8x128xf32, #tpu.memory_space<vmem>>
    %18 = tpu.memref_squeeze %17 : memref<1x8x128xf32, #tpu.memory_space<vmem>> -> memref<8x128xf32, #tpu.memory_space<vmem>>
    %19 = tpu.memref_slice %arg7[%c0_i32_11] : memref<2x!tpu.dma_semaphore, #tpu.memory_space<semaphore_mem>> -> memref<1x!tpu.dma_semaphore, #tpu.memory_space<semaphore_mem>>
    %20 = tpu.memref_squeeze %19 : memref<1x!tpu.dma_semaphore, #tpu.memory_space<semaphore_mem>> -> memref<!tpu.dma_semaphore, #tpu.memory_space<semaphore_mem>>
    tpu.wait_dma2 semaphore(%20 : memref<!tpu.dma_semaphore, #tpu.memory_space<semaphore_mem>>) src(%16 : memref<8x128xf32, #tpu.memory_space<any>>) dst(%18 : memref<8x128xf32, #tpu.memory_space<vmem>>)
    %c0_i32_15 = arith.constant 0 : i32
    %c0_i32_16 = arith.constant 0 : i32
    %c0_i32_17 = arith.constant 0 : i32
    %21 = tpu.memref_slice %arg2[%5, %c0_i32_17] : memref<32x128xf32, #tpu.memory_space<any>> -> memref<8x128xf32, #tpu.memory_space<any>>
    %c0_i32_18 = arith.constant 0 : i32
    %c0_i32_19 = arith.constant 0 : i32
    %22 = tpu.memref_slice %arg6[%c0_i32_15, %c0_i32_18, %c0_i32_19] : memref<2x8x128xf32, #tpu.memory_space<vmem>> -> memref<1x8x128xf32, #tpu.memory_space<vmem>>
    %23 = tpu.memref_squeeze %22 : memref<1x8x128xf32, #tpu.memory_space<vmem>> -> memref<8x128xf32, #tpu.memory_space<vmem>>
    %24 = tpu.memref_slice %arg8[%c0_i32_16] : memref<2x!tpu.dma_semaphore, #tpu.memory_space<semaphore_mem>> -> memref<1x!tpu.dma_semaphore, #tpu.memory_space<semaphore_mem>>
    %25 = tpu.memref_squeeze %24 : memref<1x!tpu.dma_semaphore, #tpu.memory_space<semaphore_mem>> -> memref<!tpu.dma_semaphore, #tpu.memory_space<semaphore_mem>>
    tpu.wait_dma2 semaphore(%25 : memref<!tpu.dma_semaphore, #tpu.memory_space<semaphore_mem>>) src(%21 : memref<8x128xf32, #tpu.memory_space<any>>) dst(%23 : memref<8x128xf32, #tpu.memory_space<vmem>>)
    %c0 = arith.constant 0 : index
    %c0_20 = arith.constant 0 : index
    %c0_21 = arith.constant 0 : index
    %26 = vector.load %arg5[%c0, %c0_20, %c0_21] : memref<2x8x128xf32, #tpu.memory_space<vmem>>, vector<1x8x128xf32>
    %27 = vector.shape_cast %26 : vector<1x8x128xf32> to vector<8x128xf32>
    %c0_22 = arith.constant 0 : index
    %c0_23 = arith.constant 0 : index
    %c0_24 = arith.constant 0 : index
    %28 = vector.load %arg6[%c0_22, %c0_23, %c0_24] : memref<2x8x128xf32, #tpu.memory_space<vmem>>, vector<1x8x128xf32>
    %29 = vector.shape_cast %28 : vector<1x8x128xf32> to vector<8x128xf32>
    %30 = tpu.concatenate %27, %29 in 1 : vector<8x128xf32>, vector<8x128xf32> -> vector<8x256xf32>
    %c0_25 = arith.constant 0 : index
    %c0_26 = arith.constant 0 : index
    %31 = vector.load %arg3[%c0_25, %c0_26] : memref<256x512xf32, #tpu.memory_space<vmem>>, vector<256x512xf32>
    %cst = arith.constant dense<0.000000e+00> : vector<8x512xf32>
    %32 = tpu.matmul %30, %31, %cst {dimension_numbers = #tpu.dot_dimension_numbers<[1], [0], [0], [1], [0, 0, 1, 1], [], []>} : vector<8x256xf32>, vector<256x512xf32>, vector<8x512xf32> -> vector<8x512xf32>
    %33 = vector.extract_strided_slice %32 {offsets = [0, 0], sizes = [8, 256], strides = [1, 1]} : vector<8x512xf32> to vector<8x256xf32>
    %34 = vector.extract_strided_slice %32 {offsets = [0, 256], sizes = [8, 256], strides = [1, 1]} : vector<8x512xf32> to vector<8x256xf32>
    %35 = arith.mulf %33, %33 : vector<8x256xf32>
    %36 = arith.mulf %34, %34 : vector<8x256xf32>
    %37 = arith.addf %35, %36 : vector<8x256xf32>
    %c0_27 = arith.constant 0 : index
    %c0_28 = arith.constant 0 : index
    %c0_29 = arith.constant 0 : index
    %38 = vector.load %arg4[%c0_27, %c0_28, %c0_29] : memref<1x8x256xf32, #tpu.memory_space<vmem>>, vector<1x8x256xf32>
    %39 = vector.shape_cast %38 : vector<1x8x256xf32> to vector<8x256xf32>
    %40 = vector.shape_cast %37 : vector<8x256xf32> to vector<1x8x256xf32>
    tpu.vector_store %arg4[%c0_27, %c0_28, %c0_29], %40 {strides = array<i32>} : memref<1x8x256xf32, #tpu.memory_space<vmem>>, vector<1x8x256xf32>,
    return
  }
  func.func @transform_1(%arg0: i32, %arg1: i32) -> (i32, i32) {
    %c0_i32 = arith.constant 0 : i32
    %c0_i32_0 = arith.constant 0 : i32
    %c0_i32_1 = arith.constant 0 : i32
    return %c0_i32, %c0_i32_0 : i32, i32
  }
  func.func @transform_2(%arg0: i32, %arg1: i32) -> (i32, i32, i32) {
    %c0_i32 = arith.constant 0 : i32
    %c0_i32_0 = arith.constant 0 : i32
    return %arg0, %arg1, %c0_i32 : i32, i32, i32
  }
}

</mosaic_0001>

<llo_original>
// kernel: tpu_custom_call.1
$region0: #{tpu_custom_call.1}
  #allocation0 [shape = 'u32[]', space=smem, size = 0x4, offset = 0x4, fixed_abs, tag = 'smem constant byte address 0x4 - core index']
  #allocation1 [shape = 'u32[144,128]{1,0:T(1,128)}', space=vmem, size = 0x12000, scoped, tag = 'internal scratch']
  #allocation2 [shape = 'f32[2,8,128]{2,1,0:T(8,128)}', space=vmem, size = 0x2000, scoped, tag = 'scratch operand']
  #allocation3 [shape = 'f32[2,8,128]{2,1,0:T(8,128)}', space=vmem, size = 0x2000, scoped, tag = 'scratch operand']
  #allocation4 [shape = 's32[2]{0}', space=sflag, size = 0x8, scoped, tag = 'scratch operand']
  #allocation5 [shape = 's32[2]{0}', space=sflag, size = 0x8, scoped, tag = 'scratch operand']
  #allocation10 [shape = 's32[]', space=sflag, size = 0x4, offset = 0, fixed_abs, tag = 'sflag constant byte address 0x0 - dummy sync flag']
  #allocation11 [shape = 's32[]', space=sflag, size = 0x4, offset = 0, fixed_abs, tag = 'sflag constant byte address 0x0 - dummy sync flag']
  #allocation12 [shape = 'u32[]', space=smem, size = 0x4, offset = 0x44, fixed_abs, tag = 'smem constant byte address 0x44 - assertion arg 0']
  #allocation13 [shape = 'u32[]', space=smem, size = 0x4, offset = 0x48, fixed_abs, tag = 'smem constant byte address 0x48 - assertion arg 1']
  #allocation14 [shape = 's32[]', space=sflag, size = 0x4, offset = 0, fixed_abs, tag = 'sflag constant byte address 0x0 - dummy sync flag']
  #allocation15 [shape = 's32[]', space=sflag, size = 0x4, offset = 0, fixed_abs, tag = 'sflag constant byte address 0x0 - dummy sync flag']
  %s0 = inlined_call_operand.hbm [shape: f32[32,128], index: 0, kind: input, shape index: {}]
  %s1 = inlined_call_operand.hbm [shape: f32[256,512], index: 1, kind: input, shape index: {}]
  %s2 = inlined_call_operand.hbm [shape: f32[2,8,256], index: 2, kind: output, shape index: {}]
  %s3 = sld [smem:[#allocation0]]
  $region49: #{tpu_custom_call.1} parent=0
    _
  %s5 = ssub.s32 1, %s3
  %s6 = scalar_select 0, %s5, %s3
  $region1: #{tpu_custom_call.1} parent=0
    #allocation6 [shape = 'u8[524288]{0}', space=vmem, size = 0x80000, scoped, tag = 'input window, operand 1, single buffered']
    #allocation7 [shape = 's32[2]{0}', space=sflag, size = 0x8, scoped, tag = 'scoped memory for tpu_custom_call.1']
    #allocation8 [shape = 's32[2]{0}', space=sflag, size = 0x8, scoped, tag = 'scoped memory for tpu_custom_call.1']
    #allocation9 [shape = 'u8[16384]{0}', space=vmem, size = 0x4000, scoped, tag = 'output window, operand 0']
    %7 = vsyncpa [#allocation7], 0
    %8 = vsyncpa [#allocation8], 0
    %s9 = scalar_lea.sflag [#allocation8], 1
    %10 = vsyncpa %s9, 0
    loop: start=0, step=1, limit=4
    $region2: #{tpu_custom_call.1} parent=1 // loop_pre_header
      _
    $region3: #{tpu_custom_call.1} parent=1 // loop_header
      %s12 = sphi 0, %s16
      %p13 = scmp.ge.s32.totalorder %s12, 4
      %s19 = sphi 0, %s31
      %s20 = sphi 0, %s27
      %s21 = sphi 0, %s19
      %s22 = sphi 0, %s20
      %s23 = sphi 0, %s21
      %s24 = sphi 0, %s22
      %s32 = sphi 0, %s32
      %s34 = sphi 0, %s32
      %s35 = sphi 0, %s34
      %s49 = sphi 0, %s35
      %s57 = sphi 0, %s59
      %s60 = sphi 0, %s57
      %s61 = sphi 0, %s60
      %s77 = sphi 0, %s61
    $region4: #{tpu_custom_call.1} parent=1 // loop_header_branch
      %15 = sbr.rel (%p13) target = $region8
    $region5: #{tpu_custom_call.1} parent=1 // loop_body
      %s17 = ssub.s32 %s12, 1
      %s18 = ssub.s32 %s12, 2
      %s25 = sadd.s32 1, %s20
      %p26 = scmp.ge.s32.totalorder %s25, 1
      %s27 = scalar_select %p26, 0, %s25
      %s28 = sadd.s32 1, %s19
      %s29 = scalar_select %p26, %s28, %s19
      %p30 = scmp.ge.s32.totalorder %s29, 2
      %s31 = scalar_select %p30, 0, %s29
      %s33 = sadd.s32 %s32, 1
      %p36 = scmp.eq.s32.totalorder %s12, 1
      %p37 = scmp.ne.s32.totalorder %s32, %s34
      %p38 = scmp.eq.s32.totalorder %s12, 0
      %p39 = por %p37, %p38
      %p40 = scmp.ne.s32.totalorder %s32, %s34
      %p41 = scmp.eq.s32.totalorder %s17, 1
      %p42 = por %p40, %p41
      %p43 = scmp.ne.s32.totalorder %s34, %s35
      %p44 = scmp.eq.s32.totalorder %s17, 0
      %p45 = por %p43, %p44
      %p46 = scmp.ne.s32.totalorder %s34, %s35
      %p47 = scmp.eq.s32.totalorder %s18, 1
      %p48 = por %p46, %p47
      %p50 = scmp.ne.s32.totalorder %s35, %s49
      %p51 = scmp.eq.s32.totalorder %s18, 0
      %p52 = por %p50, %p51
      %s53 = ssub.s32 %s19, %s31
      %s54 = ssub.s32 %s20, %s27
      %s55 = sor.u32 %s53, %s54
      %p56 = scmp.eq.s32.totalorder %s55, 0
      %s58 = sadd.s32 %s57, 1
      %s59 = scalar_select %p56, %s57, %s58
      %p62 = pneg %p56
      %p63 = scmp.eq.s32.totalorder %s12, 1
      %p64 = por %p62, %p63
      %p65 = scmp.ne.s32.totalorder %s57, %s60
      %p66 = scmp.eq.s32.totalorder %s12, 0
      %p67 = por %p65, %p66
      %p68 = scmp.ne.s32.totalorder %s57, %s60
      %p69 = scmp.eq.s32.totalorder %s17, 1
      %p70 = por %p68, %p69
      %p71 = scmp.ne.s32.totalorder %s60, %s61
      %p72 = scmp.eq.s32.totalorder %s17, 0
      %p73 = por %p71, %p72
      %p74 = scmp.ne.s32.totalorder %s60, %s61
      %p75 = scmp.eq.s32.totalorder %s18, 1
      %p76 = por %p74, %p75
      %p78 = scmp.ne.s32.totalorder %s61, %s77
      %p79 = scmp.eq.s32.totalorder %s18, 0
      %p80 = por %p78, %p79
      %p81 = scmp.le.s32.totalorder 1, %s12
      %p82 = scmp.lt.s32.totalorder %s12, 3
      %p83 = pnand %p81, %p82
      %p84 = pneg %p83
      // Predicated region
      $region9: #{tpu_custom_call.1} parent=5 // pred_check
        _
      $region10: #{tpu_custom_call.1} parent=5 // pred_check_branch
        %86 = sbr.rel (%p83) target = $region12
      $region11: #{tpu_custom_call.1} parent=5 // pred_region
        %s87 = ssub.s32 %s12, 1
        // Predicated region
        $region13: #{tpu_custom_call.1} parent=11 // pred_check
          %p88 = pneg %p45
        $region14: #{tpu_custom_call.1} parent=11 // pred_check_branch
          %90 = sbr.rel (%p88) target = $region16
        $region15: #{tpu_custom_call.1} parent=11 // pred_region
          %s92 = ssub.s32 16384, 16384
          %93 = vsyncadd [#allocation7], %s92
          %s94 = sshll.u32 [#allocation6], 4
          %s95 = int_to_ptr.vmem [resolvable:$true] %s94
          %100 = dma.hbm_to_vmem [thread:$0]  %s1, 16384, %s95, [#allocation7], 512, 512, 32
        $region16: #{tpu_custom_call.1} parent=11 // pred_fallthru
          _
      $region12: #{tpu_custom_call.1} parent=5 // pred_fallthru
        _
      %p101 = scmp.lt.s32.totalorder %s12, 2
      // Predicated region
      $region17: #{tpu_custom_call.1} parent=5 // pred_check
        %p102 = pneg %p101
      $region18: #{tpu_custom_call.1} parent=5 // pred_check_branch
        %104 = sbr.rel (%p102) target = $region20
      $region19: #{tpu_custom_call.1} parent=5 // pred_region
        _
      $region20: #{tpu_custom_call.1} parent=5 // pred_fallthru
        _
      %p105 = scmp.le.s32.totalorder 1, %s12
      %p106 = scmp.lt.s32.totalorder %s12, 3
      %p107 = pnand %p105, %p106
      %p108 = pneg %p107
      // Predicated region
      $region21: #{tpu_custom_call.1} parent=5 // pred_check
        _
      $region22: #{tpu_custom_call.1} parent=5 // pred_check_branch
        %110 = sbr.rel (%p107) target = $region24
      $region23: #{tpu_custom_call.1} parent=5 // pred_region
        %s111 = ssub.s32 %s12, 1
        // Predicated region
        $region25: #{tpu_custom_call.1} parent=23 // pred_check
          %p112 = pneg %p45
        $region26: #{tpu_custom_call.1} parent=23 // pred_check_branch
          %114 = sbr.rel (%p112) target = $region28
        $region27: #{tpu_custom_call.1} parent=23 // pred_region
          %115 = dma.done [#allocation7], 16384
        $region28: #{tpu_custom_call.1} parent=23 // pred_fallthru
          _
        %p116 = pneg %p45
        %p117 = pneg %p42
        %p118 = pneg %p73
        %p119 = pneg %p70
        %s120 = sand.u32 %s60, 1
        %s121 = scalar_lea.sflag [#allocation8], %s120
        %s122 = sand.u32 %s60, 1
        %s123 = smul.addr %s122, 16
        %s124 = scalar_lea.vmem [#allocation9], %s123
        %s125 = smul.u32 %s21, 16
        %s126 = smul.u32 %s22, 8
        %s127 = sadd.s32 %s125, %s126
        %s128 = sadd.s32 %s127, 1
        %s129 = smul.addr %s127, 16
        %s130 = scalar_lea.hbm %s0, %s129
        // Predicated region
        $region29: #{tpu_custom_call.1} parent=23 // pred_check
          _
        $region30: #{tpu_custom_call.1} parent=23 // pred_check_branch
          %132 = sbr.rel target = $region32
        $region31: #{tpu_custom_call.1} parent=23 // pred_region
          %133 = sst [smem:[#allocation12]] [#allocation11]
          %134 = sst [smem:[#allocation13]] [#allocation10]
        $region32: #{tpu_custom_call.1} parent=23 // pred_fallthru
          _
        %136 = shalt.err (0)
        %s138 = sshll.u32 [#allocation2], 4
        %s139 = int_to_ptr.vmem [resolvable:$true] %s138
        %141 = dma.hbm_to_vmem [thread:$0]  %s130, 128, %s139, [#allocation4]
        %s142 = smul.addr %s128, 16
        %s143 = scalar_lea.hbm %s0, %s142
        // Predicated region
        $region33: #{tpu_custom_call.1} parent=23 // pred_check
          _
        $region34: #{tpu_custom_call.1} parent=23 // pred_check_branch
          %145 = sbr.rel target = $region36
        $region35: #{tpu_custom_call.1} parent=23 // pred_region
          %146 = sst [smem:[#allocation12]] [#allocation15]
          %147 = sst [smem:[#allocation13]] [#allocation14]
        $region36: #{tpu_custom_call.1} parent=23 // pred_fallthru
          _
        %149 = shalt.err (0)
        %s151 = sshll.u32 [#allocation3], 4
        %s152 = int_to_ptr.vmem [resolvable:$true] %s151
        %154 = dma.hbm_to_vmem [thread:$0]  %s143, 128, %s152, [#allocation5]
        %s155 = smul.u32 8, 1
        %s156 = sshll.u32 %s155, 4
        %157 = dma.done [#allocation4], %s156
        %s158 = sshll.u32 %s155, 4
        %159 = dma.done [#allocation5], %s158
        %v160 = vld [vmem:[#allocation2] sm:$0xff]
        %v161 = vld [vmem:[#allocation3] sm:$0xff]
        %v162 = vld [vmem:[#allocation6] sm:$0xff]
        %v163 = vld [vmem:[#allocation6 + $0x8] sm:$0xff]
        %v164 = vld [vmem:[#allocation6 + $0x10] sm:$0xff]
        %v165 = vld [vmem:[#allocation6 + $0x18] sm:$0xff]
        %v166 = vld [vmem:[#allocation6 + $0x20] sm:$0xff]
        %v167 = vld [vmem:[#allocation6 + $0x28] sm:$0xff]
        %v168 = vld [vmem:[#allocation6 + $0x30] sm:$0xff]
        %v169 = vld [vmem:[#allocation6 + $0x38] sm:$0xff]
        %v170 = vld [vmem:[#allocation6 + $0x40] sm:$0xff]
        %v171 = vld [vmem:[#allocation6 + $0x48] sm:$0xff]
        %v172 = vld [vmem:[#allocation6 + $0x50] sm:$0xff]
        %v173 = vld [vmem:[#allocation6 + $0x58] sm:$0xff]
        %v174 = vld [vmem:[#allocation6 + $0x60] sm:$0xff]
        %v175 = vld [vmem:[#allocation6 + $0x68] sm:$0xff]
        %v176 = vld [vmem:[#allocation6 + $0x70] sm:$0xff]
        %v177 = vld [vmem:[#allocation6 + $0x78] sm:$0xff]
        %v178 = vld [vmem:[#allocation6 + $0x80] sm:$0xff]
        %v179 = vld [vmem:[#allocation6 + $0x88] sm:$0xff]
        %v180 = vld [vmem:[#allocation6 + $0x90] sm:$0xff]
        %v181 = vld [vmem:[#allocation6 + $0x98] sm:$0xff]
        %v182 = vld [vmem:[#allocation6 + $0xa0] sm:$0xff]
        %v183 = vld [vmem:[#allocation6 + $0xa8] sm:$0xff]
        %v184 = vld [vmem:[#allocation6 + $0xb0] sm:$0xff]
        %v185 = vld [vmem:[#allocation6 + $0xb8] sm:$0xff]
        %v186 = vld [vmem:[#allocation6 + $0xc0] sm:$0xff]
        %v187 = vld [vmem:[#allocation6 + $0xc8] sm:$0xff]
        %v188 = vld [vmem:[#allocation6 + $0xd0] sm:$0xff]
        %v189 = vld [vmem:[#allocation6 + $0xd8] sm:$0xff]
        %v190 = vld [vmem:[#allocation6 + $0xe0] sm:$0xff]
        %v191 = vld [vmem:[#allocation6 + $0xe8] sm:$0xff]
        %v192 = vld [vmem:[#allocation6 + $0xf0] sm:$0xff]
        %v193 = vld [vmem:[#allocation6 + $0xf8] sm:$0xff]
        %v194 = vld [vmem:[#allocation6 + $0x100] sm:$0xff]
        %v195 = vld [vmem:[#allocation6 + $0x108] sm:$0xff]
        %v196 = vld [vmem:[#allocation6 + $0x110] sm:$0xff]
        %v197 = vld [vmem:[#allocation6 + $0x118] sm:$0xff]
        %v198 = vld [vmem:[#allocation6 + $0x120] sm:$0xff]
        %v199 = vld [vmem:[#allocation6 + $0x128] sm:$0xff]
        %v200 = vld [vmem:[#allocation6 + $0x130] sm:$0xff]
        %v201 = vld [vmem:[#allocation6 + $0x138] sm:$0xff]
        %v202 = vld [vmem:[#allocation6 + $0x140] sm:$0xff]
        %v203 = vld [vmem:[#allocation6 + $0x148] sm:$0xff]
        %v204 = vld [vmem:[#allocation6 + $0x150] sm:$0xff]
        %v205 = vld [vmem:[#allocation6 + $0x158] sm:$0xff]
        %v206 = vld [vmem:[#allocation6 + $0x160] sm:$0xff]
        %v207 = vld [vmem:[#allocation6 + $0x168] sm:$0xff]
        %v208 = vld [vmem:[#allocation6 + $0x170] sm:$0xff]
        %v209 = vld [vmem:[#allocation6 + $0x178] sm:$0xff]
        %v210 = vld [vmem:[#allocation6 + $0x180] sm:$0xff]
        %v211 = vld [vmem:[#allocation6 + $0x188] sm:$0xff]
        %v212 = vld [vmem:[#allocation6 + $0x190] sm:$0xff]
        %v213 = vld [vmem:[#allocation6 + $0x198] sm:$0xff]
        %v214 = vld [vmem:[#allocation6 + $0x1a0] sm:$0xff]
        %v215 = vld [vmem:[#allocation6 + $0x1a8] sm:$0xff]
        %v216 = vld [vmem:[#allocation6 + $0x1b0] sm:$0xff]
        %v217 = vld [vmem:[#allocation6 + $0x1b8] sm:$0xff]
        %v218 = vld [vmem:[#allocation6 + $0x1c0] sm:$0xff]
        %v219 = vld [vmem:[#allocation6 + $0x1c8] sm:$0xff]
        %v220 = vld [vmem:[#allocation6 + $0x1d0] sm:$0xff]
        %v221 = vld [vmem:[#allocation6 + $0x1d8] sm:$0xff]
        %v222 = vld [vmem:[#allocation6 + $0x1e0] sm:$0xff]
        %v223 = vld [vmem:[#allocation6 + $0x1e8] sm:$0xff]
        %v224 = vld [vmem:[#allocation6 + $0x1f0] sm:$0xff]
        %v225 = vld [vmem:[#allocation6 + $0x1f8] sm:$0xff]
        %v226 = vld [vmem:[#allocation6 + $0x200] sm:$0xff]
        %v227 = vld [vmem:[#allocation6 + $0x208] sm:$0xff]
        %v228 = vld [vmem:[#allocation6 + $0x210] sm:$0xff]
        %v229 = vld [vmem:[#allocation6 + $0x218] sm:$0xff]
        %v230 = vld [vmem:[#allocation6 + $0x220] sm:$0xff]
        %v231 = vld [vmem:[#allocation6 + $0x228] sm:$0xff]
        %v232 = vld [vmem:[#allocation6 + $0x230] sm:$0xff]
        %v233 = vld [vmem:[#allocation6 + $0x238] sm:$0xff]
        %v234 = vld [vmem:[#allocation6 + $0x240] sm:$0xff]
        %v235 = vld [vmem:[#allocation6 + $0x248] sm:$0xff]
        %v236 = vld [vmem:[#allocation6 + $0x250] sm:$0xff]
        %v237 = vld [vmem:[#allocation6 + $0x258] sm:$0xff]
        %v238 = vld [vmem:[#allocation6 + $0x260] sm:$0xff]
        %v239 = vld [vmem:[#allocation6 + $0x268] sm:$0xff]
        %v240 = vld [vmem:[#allocation6 + $0x270] sm:$0xff]
        %v241 = vld [vmem:[#allocation6 + $0x278] sm:$0xff]
        %v242 = vld [vmem:[#allocation6 + $0x280] sm:$0xff]
        %v243 = vld [vmem:[#allocation6 + $0x288] sm:$0xff]
        %v244 = vld [vmem:[#allocation6 + $0x290] sm:$0xff]
        %v245 = vld [vmem:[#allocation6 + $0x298] sm:$0xff]
        %v246 = vld [vmem:[#allocation6 + $0x2a0] sm:$0xff]
        %v247 = vld [vmem:[#allocation6 + $0x2a8] sm:$0xff]
        %v248 = vld [vmem:[#allocation6 + $0x2b0] sm:$0xff]
        %v249 = vld [vmem:[#allocation6 + $0x2b8] sm:$0xff]
        %v250 = vld [vmem:[#allocation6 + $0x2c0] sm:$0xff]
        %v251 = vld [vmem:[#allocation6 + $0x2c8] sm:$0xff]
        %v252 = vld [vmem:[#allocation6 + $0x2d0] sm:$0xff]
        %v253 = vld [vmem:[#allocation6 + $0x2d8] sm:$0xff]
        %v254 = vld [vmem:[#allocation6 + $0x2e0] sm:$0xff]
        %v255 = vld [vmem:[#allocation6 + $0x2e8] sm:$0xff]
        %v256 = vld [vmem:[#allocation6 + $0x2f0] sm:$0xff]
        %v257 = vld [vmem:[#allocation6 + $0x2f8] sm:$0xff]
        %v258 = vld [vmem:[#allocation6 + $0x300] sm:$0xff]
        %v259 = vld [vmem:[#allocation6 + $0x308] sm:$0xff]
        %v260 = vld [vmem:[#allocation6 + $0x310] sm:$0xff]
        %v261 = vld [vmem:[#allocation6 + $0x318] sm:$0xff]
        %v262 = vld [vmem:[#allocation6 + $0x320] sm:$0xff]
        %v263 = vld [vmem:[#allocation6 + $0x328] sm:$0xff]
        %v264 = vld [vmem:[#allocation6 + $0x330] sm:$0xff]
        %v265 = vld [vmem:[#allocation6 + $0x338] sm:$0xff]
        %v266 = vld [vmem:[#allocation6 + $0x340] sm:$0xff]
        %v267 = vld [vmem:[#allocation6 + $0x348] sm:$0xff]
        %v268 = vld [vmem:[#allocation6 + $0x350] sm:$0xff]
        %v269 = vld [vmem:[#allocation6 + $0x358] sm:$0xff]
        %v270 = vld [vmem:[#allocation6 + $0x360] sm:$0xff]
        %v271 = vld [vmem:[#allocation6 + $0x368] sm:$0xff]
        %v272 = vld [vmem:[#allocation6 + $0x370] sm:$0xff]
        %v273 = vld [vmem:[#allocation6 + $0x378] sm:$0xff]
        %v274 = vld [vmem:[#allocation6 + $0x380] sm:$0xff]
        %v275 = vld [vmem:[#allocation6 + $0x388] sm:$0xff]
        %v276 = vld [vmem:[#allocation6 + $0x390] sm:$0xff]
        %v277 = vld [vmem:[#allocation6 + $0x398] sm:$0xff]
        %v278 = vld [vmem:[#allocation6 + $0x3a0] sm:$0xff]
        %v279 = vld [vmem:[#allocation6 + $0x3a8] sm:$0xff]
        %v280 = vld [vmem:[#allocation6 + $0x3b0] sm:$0xff]
        %v281 = vld [vmem:[#allocation6 + $0x3b8] sm:$0xff]
        %v282 = vld [vmem:[#allocation6 + $0x3c0] sm:$0xff]
        %v283 = vld [vmem:[#allocation6 + $0x3c8] sm:$0xff]
        %v284 = vld [vmem:[#allocation6 + $0x3d0] sm:$0xff]
        %v285 = vld [vmem:[#allocation6 + $0x3d8] sm:$0xff]
        %v286 = vld [vmem:[#allocation6 + $0x3e0] sm:$0xff]
        %v287 = vld [vmem:[#allocation6 + $0x3e8] sm:$0xff]
        %v288 = vld [vmem:[#allocation6 + $0x3f0] sm:$0xff]
        %v289 = vld [vmem:[#allocation6 + $0x3f8] sm:$0xff]
        %290 = vmatprep.subr.mxu0 %v223
        %291 = vmatpush1.msra.mxu0 %v222
        %292 = vmatprep.subr.mxu0 %v219
        %293 = vmatpush1.msra.mxu0 %v218
        %294 = vmatprep.subr.mxu0 %v215
        %295 = vmatpush1.msra.mxu0 %v214
        %296 = vmatprep.subr.mxu0 %v211
        %297 = vmatpush1.msra.mxu0 %v210
        %298 = vmatprep.subr.mxu0 %v207
        %299 = vmatpush1.msra.mxu0 %v206
        %300 = vmatprep.subr.mxu0 %v203
        %301 = vmatpush1.msra.mxu0 %v202
        %302 = vmatprep.subr.mxu0 %v199
        %303 = vmatpush1.msra.mxu0 %v198
        %304 = vmatprep.subr.mxu0 %v195
        %305 = vmatpush1.msra.mxu0 %v194
        %306 = vmatprep.subr.mxu0 %v191
        %307 = vmatpush1.msra.mxu0 %v190
        %308 = vmatprep.subr.mxu0 %v187
        %309 = vmatpush1.msra.mxu0 %v186
        %310 = vmatprep.subr.mxu0 %v183
        %311 = vmatpush1.msra.mxu0 %v182
        %312 = vmatprep.subr.mxu0 %v179
        %313 = vmatpush1.msra.mxu0 %v178
        %314 = vmatprep.subr.mxu0 %v175
        %315 = vmatpush1.msra.mxu0 %v174
        %316 = vmatprep.subr.mxu0 %v171
        %317 = vmatpush1.msra.mxu0 %v170
        %318 = vmatprep.subr.mxu0 %v167
        %319 = vmatpush1.msra.mxu0 %v166
        %320 = vmatprep.subr.mxu0 %v163
        %321 = vmatpush1.msra.mxu0 %v162
        %322 = vmatprep.subr.mxu0 %v287
        %323 = vmatpush2.msra.mxu0 %v286
        %324 = vmatprep.subr.mxu0 %v283
        %325 = vmatpush2.msra.mxu0 %v282
        %326 = vmatprep.subr.mxu0 %v279
        %327 = vmatpush2.msra.mxu0 %v278
        %328 = vmatprep.subr.mxu0 %v275
        %329 = vmatpush2.msra.mxu0 %v274
        %330 = vmatprep.subr.mxu0 %v271
        %331 = vmatpush2.msra.mxu0 %v270
        %332 = vmatprep.subr.mxu0 %v267
        %333 = vmatpush2.msra.mxu0 %v266
        %334 = vmatprep.subr.mxu0 %v263
        %335 = vmatpush2.msra.mxu0 %v262
        %336 = vmatprep.subr.mxu0 %v259
        %337 = vmatpush2.msra.mxu0 %v258
        %338 = vmatprep.subr.mxu0 %v255
        %339 = vmatpush2.msra.mxu0 %v254
        %340 = vmatprep.subr.mxu0 %v251
        %341 = vmatpush2.msra.mxu0 %v250
        %342 = vmatprep.subr.mxu0 %v247
        %343 = vmatpush2.msra.mxu0 %v246
        %344 = vmatprep.subr.mxu0 %v243
        %345 = vmatpush2.msra.mxu0 %v242
        %346 = vmatprep.subr.mxu0 %v239
        %347 = vmatpush2.msra.mxu0 %v238
        %348 = vmatprep.subr.mxu0 %v235
        %349 = vmatpush2.msra.mxu0 %v234
        %350 = vmatprep.subr.mxu0 %v231
        %351 = vmatpush2.msra.mxu0 %v230
        %352 = vmatprep.subr.mxu0 %v227
        %353 = vmatpush2.msra.mxu0 %v226
        %354 = vmatprep.mubr.f32.mxu0 %v161
        %355 = vmatmul.mubr.f32.gmra.mxu0 %v160
        %v356 = vpop.f32.mrf.mxu0
        %v357 = vadd.f32 0.0, %v356
        %v358 = vpop.f32.mrf.mxu0
        %v359 = vadd.f32 0.0, %v358
        %360 = vdwg.mxu0
        %361 = vmatprep.subr.mxu0 %v225
        %362 = vmatpush1.msra.mxu0 %v224
        %363 = vmatprep.subr.mxu0 %v221
        %364 = vmatpush1.msra.mxu0 %v220
        %365 = vmatprep.subr.mxu0 %v217
        %366 = vmatpush1.msra.mxu0 %v216
        %367 = vmatprep.subr.mxu0 %v213
        %368 = vmatpush1.msra.mxu0 %v212
        %369 = vmatprep.subr.mxu0 %v209
        %370 = vmatpush1.msra.mxu0 %v208
        %371 = vmatprep.subr.mxu0 %v205
        %372 = vmatpush1.msra.mxu0 %v204
        %373 = vmatprep.subr.mxu0 %v201
        %374 = vmatpush1.msra.mxu0 %v200
        %375 = vmatprep.subr.mxu0 %v197
        %376 = vmatpush1.msra.mxu0 %v196
        %377 = vmatprep.subr.mxu0 %v193
        %378 = vmatpush1.msra.mxu0 %v192
        %379 = vmatprep.subr.mxu0 %v189
        %380 = vmatpush1.msra.mxu0 %v188
        %381 = vmatprep.subr.mxu0 %v185
        %382 = vmatpush1.msra.mxu0 %v184
        %383 = vmatprep.subr.mxu0 %v181
        %384 = vmatpush1.msra.mxu0 %v180
        %385 = vmatprep.subr.mxu0 %v177
        %386 = vmatpush1.msra.mxu0 %v176
        %387 = vmatprep.subr.mxu0 %v173
        %388 = vmatpush1.msra.mxu0 %v172
        %389 = vmatprep.subr.mxu0 %v169
        %390 = vmatpush1.msra.mxu0 %v168
        %391 = vmatprep.subr.mxu0 %v165
        %392 = vmatpush1.msra.mxu0 %v164
        %393 = vmatprep.subr.mxu0 %v289
        %394 = vmatpush2.msra.mxu0 %v288
        %395 = vmatprep.subr.mxu0 %v285
        %396 = vmatpush2.msra.mxu0 %v284
        %397 = vmatprep.subr.mxu0 %v281
        %398 = vmatpush2.msra.mxu0 %v280
        %399 = vmatprep.subr.mxu0 %v277
        %400 = vmatpush2.msra.mxu0 %v276
        %401 = vmatprep.subr.mxu0 %v273
        %402 = vmatpush2.msra.mxu0 %v272
        %403 = vmatprep.subr.mxu0 %v269
        %404 = vmatpush2.msra.mxu0 %v268
        %405 = vmatprep.subr.mxu0 %v265
        %406 = vmatpush2.msra.mxu0 %v264
        %407 = vmatprep.subr.mxu0 %v261
        %408 = vmatpush2.msra.mxu0 %v260
        %409 = vmatprep.subr.mxu0 %v257
        %410 = vmatpush2.msra.mxu0 %v256
        %411 = vmatprep.subr.mxu0 %v253
        %412 = vmatpush2.msra.mxu0 %v252
        %413 = vmatprep.subr.mxu0 %v249
        %414 = vmatpush2.msra.mxu0 %v248
        %415 = vmatprep.subr.mxu0 %v245
        %416 = vmatpush2.msra.mxu0 %v244
        %417 = vmatprep.subr.mxu0 %v241
        %418 = vmatpush2.msra.mxu0 %v240
        %419 = vmatprep.subr.mxu0 %v237
        %420 = vmatpush2.msra.mxu0 %v236
        %421 = vmatprep.subr.mxu0 %v233
        %422 = vmatpush2.msra.mxu0 %v232
        %423 = vmatprep.subr.mxu0 %v229
        %424 = vmatpush2.msra.mxu0 %v228
        %425 = vmatprep.mubr.f32.mxu0 %v161
        %426 = vmatmul.mubr.f32.gmra.mxu0 %v160
        %v427 = vpop.f32.mrf.mxu0
        %v428 = vadd.f32 0.0, %v427
        %v429 = vpop.f32.mrf.mxu0
        %v430 = vadd.f32 0.0, %v429
        %431 = vdwg.mxu0
        %v432 = vmul.f32 %v357, %v357
        %v433 = vmul.f32 %v359, %v359
        %v434 = vmul.f32 %v428, %v428
        %v435 = vmul.f32 %v430, %v430
        %v436 = vadd.f32 %v432, %v434
        %v437 = vadd.f32 %v433, %v435
        %438 = vst [vmem:[%s124] sm:$0xff] %v436
        %439 = vst [vmem:[%s124 + $0x8] sm:$0xff] %v437
        %s440 = sand.u32 %s60, 1
        %s441 = scalar_lea.sflag [#allocation8], %s440
        %s442 = sand.u32 %s60, 1
        %s443 = smul.addr %s442, 16
        %s444 = scalar_lea.vmem [#allocation9], %s443
        // Predicated region
        $region37: #{tpu_custom_call.1} parent=23 // pred_check
          %p445 = pneg %p70
        $region38: #{tpu_custom_call.1} parent=23 // pred_check_branch
          %447 = sbr.rel (%p445) target = $region40
        $region39: #{tpu_custom_call.1} parent=23 // pred_region
          %s449 = ssub.s32 256, 256
          %450 = vsyncadd %s441, %s449
          %s451 = smul.addr %s22, 2
          %s452 = smul.addr %s21, 2
          %s453 = sadd.s32 %s451, %s452
          %s454 = smul.addr %s453, 128
          %s455 = scalar_lea.hbm %s2, %s454
          %s457 = sshll.u32 %s444, 4
          %s458 = int_to_ptr.vmem [resolvable:$true] %s457
          %460 = dma.vmem_to_hbm [thread:$0]  %s458, 256, %s455, %s441
        $region40: #{tpu_custom_call.1} parent=23 // pred_fallthru
          _
      $region24: #{tpu_custom_call.1} parent=5 // pred_fallthru
        _
      %p461 = scmp.le.s32.totalorder 2, %s12
      // Predicated region
      $region41: #{tpu_custom_call.1} parent=5 // pred_check
        %p462 = pneg %p461
      $region42: #{tpu_custom_call.1} parent=5 // pred_check_branch
        %464 = sbr.rel (%p462) target = $region44
      $region43: #{tpu_custom_call.1} parent=5 // pred_region
        %s465 = ssub.s32 %s12, 2
        // Predicated region
        $region45: #{tpu_custom_call.1} parent=43 // pred_check
          %p466 = pneg %p76
        $region46: #{tpu_custom_call.1} parent=43 // pred_check_branch
          %468 = sbr.rel (%p466) target = $region48
        $region47: #{tpu_custom_call.1} parent=43 // pred_region
          %s469 = sand.u32 %s61, 1
          %s470 = scalar_lea.sflag [#allocation8], %s469
          %s471 = sand.u32 %s61, 1
          %s472 = smul.addr %s471, 16
          %s473 = scalar_lea.vmem [#allocation9], %s472
          %474 = dma.done %s470, 256
        $region48: #{tpu_custom_call.1} parent=43 // pred_fallthru
          _
      $region44: #{tpu_custom_call.1} parent=5 // pred_fallthru
        _
    $region6: #{tpu_custom_call.1} parent=1 // loop_footer
      %s16 = sadd.s32 1, %s12
    $region7: #{tpu_custom_call.1} parent=1 // loop_footer_branch
      %11 = sbr.rel target = $region3
    $region8: #{tpu_custom_call.1} parent=1 // loop_exit
      _
    %475 = vsyncpa [#allocation7], 1
    %s476 = scalar_lea.sflag [#allocation7], 1
    %477 = vsyncpa %s476, 1
    %478 = vsyncpa [#allocation8], 1
    %s479 = scalar_lea.sflag [#allocation8], 1
    %480 = vsyncpa %s479, 1
  %481 = vsyncmov [#allocation4]
  %s482 = vpop.sfrf %481
  %p483 = scmp.eq.s32.totalorder %s482, 0
  %p484 = pneg %p483
  %486 = shalt.err (%p484)
  %s487 = scalar_lea.sflag [#allocation4], 1
  %488 = vsyncmov %s487
  %s489 = vpop.sfrf %488
  %p490 = scmp.eq.s32.totalorder %s489, 0
  %p491 = pneg %p490
  %493 = shalt.err (%p491)
  %494 = vsyncmov [#allocation5]
  %s495 = vpop.sfrf %494
  %p496 = scmp.eq.s32.totalorder %s495, 0
  %p497 = pneg %p496
  %499 = shalt.err (%p497)
  %s500 = scalar_lea.sflag [#allocation5], 1
  %501 = vsyncmov %s500
  %s502 = vpop.sfrf %501
  %p503 = scmp.eq.s32.totalorder %s502, 0
  %p504 = pneg %p503
  %506 = shalt.err (%p504)

</llo_original>
